<compile_context>
chip_gen: v7x
topology: tpu7x:2x2x1
jax: 0.10.0
libtpu: 0.0.40
codegen_flags: <defaults>
</compile_context>

<pallas_src>
import math
import numpy as np
import jax
import jax.numpy as jnp
from jax import lax
from jax.experimental import pallas as pl

HIDDEN = 32
HEADS = 4
LATENT = 16
FFN = 64
EPS = 1e-5
LANE = 128
SQRT_2_OVER_PI = 0.7978845608028654
NEG_INF = -1e30


# ------------------------------- slab layout (rows) --------------------------------

def _slab_layout(D, L, F, BS, H):
    """Row offsets of each block inside the packed (R, 128) parameter slab."""
    HB = H * BS
    off = {}
    r = 0
    off["w_qdkv"] = r; r += D      # (D,128)   [ q' | latent | 0 ]     (ln1 + scale folded)
    off["w_ukv"] = r;  r += LANE   # (128,128) rows D:D+L = [ Wuk | Wuv | 0 ]
    off["w_o"] = r;    r += LANE   # (128,128) rows D:2D  = Wo
    off["w_1"] = r;    r += D      # (D,128)   [ W1' | 0 ]             (ln2 folded)
    off["w_2"] = r;    r += LANE   # (128,128) rows 0:F   = W2
    off["bias"] = r;   r += 8      # rows: b_qdkv, b_ukv, b_o, b_1, b_2, latmask, 0, 0
    off["qmask"] = r;  r += HB     # per-head q lane mask  (head-stacked rows)
    off["vmask"] = r;  r += HB     # per-head v lane mask
    off["abias"] = r;  r += HB     # additive block-causal bias, cols 0:BS
    off["total"] = r
    return off


# ---------------------------------- Pallas kernel ----------------------------------

def _make_kernel(D, L, F, BS, H):
    HB = H * BS
    off = _slab_layout(D, L, F, BS, H)

    def _ln_core(v):                       # LayerNorm without affine (folded into weights)
        mu = jnp.mean(v, axis=-1, keepdims=True)
        c = v - mu
        var = jnp.mean(c * c, axis=-1, keepdims=True)
        return c * lax.rsqrt(var + EPS)

    def _gelu_tanh(v):                     # tanh-approx GELU: 1 EUP tanh + few VPU ops
        return 0.5 * v * (1.0 + jnp.tanh(SQRT_2_OVER_PI * (v + 0.044715 * v * v * v)))

    def kernel(x_ref, slab_ref, out_ref):
        x = x_ref[...]                                      # (BS,128); real cols 0:D, rest 0

        brow = slab_ref[off["bias"]:off["bias"] + 8, :]     # one aligned (8,128) load
        b_qdkv, b_ukv = brow[0:1], brow[1:2]
        b_o, b_1, b_2 = brow[2:3], brow[3:4], brow[4:5]
        latmask = brow[5:6]                                 # 1.0 on cols D:D+L

        # ---- LN1 (affine folded) + fused q|latent projection ----
        z1 = _ln_core(x[:, :D])                             # stats over real cols only
        qdkv = jnp.dot(z1, slab_ref[off["w_qdkv"]:off["w_qdkv"] + D, :],
                       preferred_element_type=jnp.float32) + b_qdkv   # (BS,128): q|latent|0

        # ---- fused k|v up-projection (zero weight rows select the latent cols) ----
        kv = jnp.dot(qdkv, slab_ref[off["w_ukv"]:off["w_ukv"] + LANE, :],
                     preferred_element_type=jnp.float32) + b_ukv      # (BS,128): k|v|0

        # ---- all-head attention, heads stacked along sublanes (no per-head slices) ----
        qmask = slab_ref[off["qmask"]:off["qmask"] + HB, :]
        vmask = slab_ref[off["vmask"]:off["vmask"] + HB, :]
        abias = slab_ref[off["abias"]:off["abias"] + HB, :BS]
        qtall = jnp.concatenate([qdkv] * H, axis=0) * qmask           # (HB,128) head-selected q
        sc = lax.dot_general(qtall, kv, (((1,), (1,)), ((), ())),
                             preferred_element_type=jnp.float32)      # (HB,BS) all-head scores
        sc = sc + abias                                               # block-causal additive mask
        sc = sc - jnp.max(sc, axis=-1, keepdims=True)
        p = jnp.exp(sc)
        p = p * pl.reciprocal(jnp.sum(p, axis=-1, keepdims=True), approx=True)
        ov = jnp.dot(p, kv, preferred_element_type=jnp.float32) * vmask  # (HB,128), head diag blocks
        attn_pre = ov[0:BS]
        for h in range(1, H):                                          # static unroll, H-1 adds
            attn_pre = attn_pre + ov[h * BS:(h + 1) * BS]              # (BS,128): heads at cols D:2D
        attn_out = jnp.dot(attn_pre, slab_ref[off["w_o"]:off["w_o"] + LANE, :],
                           preferred_element_type=jnp.float32) + b_o   # (BS,128): real cols 0:D

        x1 = x + attn_out

        # ---- LN2 (affine folded) + GELU FFN ----
        z2 = _ln_core(x1[:, :D])
        hid = jnp.dot(z2, slab_ref[off["w_1"]:off["w_1"] + D, :],
                      preferred_element_type=jnp.float32) + b_1
        hid = _gelu_tanh(hid)                                          # padded lanes stay 0
        ffn = jnp.dot(hid, slab_ref[off["w_2"]:off["w_2"] + LANE, :],
                      preferred_element_type=jnp.float32) + b_2

        # ---- single lane-dense writeback: [ y | latent cache | 0 ] ----
        out_ref[...] = (x1 + ffn + qdkv * latmask).astype(out_ref.dtype)

    return kernel


# ------------------------------- host-side param prep -------------------------------

def prepare_params(p, B, S, *, num_heads=HEADS):
    """One-time host packing: LN-affine + attention-scale folds, 128-lane zero padding,
    head/causal masks, everything concatenated into a single (R, 128) f32 slab."""
    D = p["wq"].shape[0]
    L = p["wdkv"].shape[1]
    F = p["w1"].shape[1]
    H = num_heads
    Dh = D // H
    BS = B * S
    HB = H * BS
    off = _slab_layout(D, L, F, BS, H)
    scale = 1.0 / math.sqrt(Dh)

    g = lambda name: np.asarray(p[name], np.float32)
    ln1w, ln1b = g("ln1_w").reshape(D), g("ln1_b").reshape(D)
    ln2w, ln2b = g("ln2_w").reshape(D), g("ln2_b").reshape(D)
    wq, bq = g("wq"), g("bq").reshape(D)
    wdkv, bdkv = g("wdkv"), g("bdkv").reshape(L)
    wuk, buk = g("wuk"), g("buk").reshape(D)
    wuv, buv = g("wuv"), g("buv").reshape(D)
    wo, bo = g("wo"), g("bo").reshape(D)
    w1, b1 = g("w1"), g("b1").reshape(F)
    w2, b2 = g("w2"), g("b2").reshape(D)

    slab = np.zeros((off["total"], LANE), np.float32)

    # fused q|latent projection, ln1 affine + 1/sqrt(Dh) folded in
    slab[off["w_qdkv"]:off["w_qdkv"] + D, 0:D] = ln1w[:, None] * wq * scale
    slab[off["w_qdkv"]:off["w_qdkv"] + D, D:D + L] = ln1w[:, None] * wdkv
    # fused k|v up-projection; real rows sit at the latent column positions of qdkv
    slab[off["w_ukv"] + D:off["w_ukv"] + D + L, 0:D] = wuk
    slab[off["w_ukv"] + D:off["w_ukv"] + D + L, D:2 * D] = wuv
    # Wo; attention output lives in cols D:2D of attn_pre (v-column layout == head concat)
    slab[off["w_o"] + D:off["w_o"] + 2 * D, 0:D] = wo
    # FFN
    slab[off["w_1"]:off["w_1"] + D, 0:F] = ln2w[:, None] * w1
    slab[off["w_2"]:off["w_2"] + F, 0:D] = w2
    # bias rows (zero-padded to 128 lanes)
    rb = off["bias"]
    slab[rb + 0, 0:D] = (ln1b @ wq + bq) * scale
    slab[rb + 0, D:D + L] = ln1b @ wdkv + bdkv
    slab[rb + 1, 0:D] = buk
    slab[rb + 1, D:2 * D] = buv
    slab[rb + 2, 0:D] = bo
    slab[rb + 3, 0:F] = ln2b @ w1 + b1
    slab[rb + 4, 0:D] = b2
    slab[rb + 5, D:D + L] = 1.0                       # latent-cache lane mask
    # per-head lane masks for the head-stacked (H*BS) score rows
    for h in range(H):
        slab[off["qmask"] + h * BS:off["qmask"] + (h + 1) * BS, h * Dh:(h + 1) * Dh] = 1.0
        slab[off["vmask"] + h * BS:off["vmask"] + (h + 1) * BS, D + h * Dh:D + (h + 1) * Dh] = 1.0
    # additive block-diagonal causal bias over the flattened B*S axis, tiled over heads
    idx = np.arange(BS)
    keep = ((idx[:, None] // S) == (idx[None, :] // S)) & (idx[None, :] <= idx[:, None])
    bias16 = np.where(keep, 0.0, NEG_INF).astype(np.float32)
    slab[off["abias"]:off["abias"] + HB, 0:BS] = np.tile(bias16, (H, 1))

    return jnp.asarray(slab)


# ---------------------------------- host wrapper -----------------------------------

def _full_spec(shape):
    n = len(shape)
    return pl.BlockSpec(shape, lambda *_, _n=n: (0,) * _n)


def transformer_block(x, slab, *, latent_dim=LATENT, ffn_dim=FFN, num_heads=HEADS, cache=None):
    # TODO(synk): incremental-decode path (cache != None, concat past latents) not implemented.
    B, S, D = x.shape
    L = latent_dim
    BS = B * S
    HB = num_heads * BS
    # lane-dense residual stream: real data in cols 0:D, zeros elsewhere (free XLA pad)
    x2 = jnp.pad(x.reshape(BS, D), ((0, 0), (0, LANE - D)))

    kernel = _make_kernel(D, L, ffn_dim, BS, num_heads)

    flops = (2 * BS * D * LANE            # q|latent projection
             + 2 * BS * LANE * LANE       # k|v up-projection
             + 2 * HB * LANE * BS         # scores
             + 2 * HB * BS * LANE         # P.V
             + 2 * BS * LANE * LANE       # Wo
             + 2 * BS * D * LANE          # FFN fc1
             + 2 * BS * LANE * LANE)      # FFN fc2
    transcendentals = HB * BS + BS * LANE + HB
    bytes_accessed = 4 * (int(slab.size) + 2 * BS * LANE)

    merged = pl.pallas_call(
        kernel,                           # no grid: one invocation, whole problem
        in_specs=[_full_spec((BS, LANE)), _full_spec(tuple(slab.shape))],
        out_specs=_full_spec((BS, LANE)),
        out_shape=jax.ShapeDtypeStruct((BS, LANE), x.dtype),
        cost_estimate=pl.CostEstimate(flops=flops, transcendentals=transcendentals,
                                      bytes_accessed=bytes_accessed),
    )(x2, slab)

    out = merged[:, :D].reshape(B, S, D)            # free HBM slices + reshapes
    new_cache = merged[:, D:D + L].reshape(B, S, L)
    return out, new_cache


# -------------------------------- pure-JAX reference --------------------------------

def reference(x, p):
    def ln(y, w, b):
        mu = y.mean(-1, keepdims=True)
        var = ((y - mu) ** 2).mean(-1, keepdims=True)
        return (y - mu) / jnp.sqrt(var + EPS) * w + b

    B, S, D = x.shape
    H, Dh = HEADS, D // HEADS
    nx = ln(x, p["ln1_w"], p["ln1_b"])
    q = nx @ p["wq"] + p["bq"]
    lat = nx @ p["wdkv"] + p["bdkv"]
    k = lat @ p["wuk"] + p["buk"]
    v = lat @ p["wuv"] + p["buv"]
    qh = q.reshape(B, S, H, Dh).transpose(0, 2, 1, 3)
    kh = k.reshape(B, S, H, Dh).transpose(0, 2, 1, 3)
    vh = v.reshape(B, S, H, Dh).transpose(0, 2, 1, 3)
    sc = (qh @ kh.transpose(0, 1, 3, 2)) / math.sqrt(Dh)
    mask = jnp.tril(jnp.ones((S, S), bool))
    sc = jnp.where(mask, sc, -1e30)
    pr = jax.nn.softmax(sc, axis=-1)
    att = (pr @ vh).transpose(0, 2, 1, 3).reshape(B, S, D)
    attn_out = att @ p["wo"] + p["bo"]
    x1 = x + attn_out
    nx2 = ln(x1, p["ln2_w"], p["ln2_b"])
    h = jax.nn.gelu(nx2 @ p["w1"] + p["b1"], approximate=False)
    ffn_out = h @ p["w2"] + p["b2"]
    return x1 + ffn_out, lat


# --------------------------------------- main ---------------------------------------

def init_params(key):
    D, L, F = HIDDEN, LATENT, FFN
    ks = jax.random.split(key, 16)

    def w(k, shape):
        return (0.02 * jax.random.normal(k, shape)).astype(jnp.float32)

    return {
        "ln1_w": jnp.ones((1, D), jnp.float32) + w(ks[0], (1, D)),
        "ln1_b": w(ks[1], (1, D)),
        "wq": w(ks[2], (D, D)), "bq": w(ks[3], (1, D)),
        "wdkv": w(ks[4], (D, L)), "bdkv": w(ks[5], (1, L)),
        "wuk": w(ks[6], (L, D)), "buk": w(ks[7], (1, D)),
        "wuv": w(ks[8], (L, D)), "buv": w(ks[9], (1, D)),
        "wo": w(ks[10], (D, D)), "bo": w(ks[11], (1, D)),
        "ln2_w": jnp.ones((1, D), jnp.float32) + w(ks[12], (1, D)),
        "ln2_b": w(ks[13], (1, D)),
        "w1": w(ks[14], (D, F)), "b1": jnp.zeros((1, F), jnp.float32),
        "w2": w(ks[15], (F, D)), "b2": jnp.zeros((1, D), jnp.float32),
    }


if __name__ == "__main__":
    B, S = 2, 8
    key = jax.random.PRNGKey(0)
    k_x, k_p = jax.random.split(key)
    x = jax.random.normal(k_x, (B, S, HIDDEN), jnp.float32)
    params = init_params(k_p)
    slab = prepare_params(params, B, S)        # one-time host-side packing / folding

    out, cache = transformer_block(x, slab)
    out = jax.block_until_ready(out)
    cache = jax.block_until_ready(cache)

    ref_out, ref_cache = reference(x, params)
    np.testing.assert_allclose(np.asarray(out), np.asarray(ref_out), rtol=2e-3, atol=2e-3)
    np.testing.assert_allclose(np.asarray(cache), np.asarray(ref_cache), rtol=2e-3, atol=2e-3)

    print("KERNEL_OK")
</pallas_src>

<mosaic_0001>
module attributes {stable_mosaic.version = 11 : i64} {
  func.func @kernel(%arg0: memref<16x128xf32, #tpu.memory_space<vmem>>, %arg1: memref<648x128xf32, #tpu.memory_space<vmem>>, %arg2: memref<16x128xf32, #tpu.memory_space<vmem>>) attributes {dimension_semantics = [], scalar_prefetch = 0 : i64, scratch_operands = 0 : i64, tpu.core_type = #tpu.core_type<tc>} {
    %c0 = arith.constant 0 : index
    %c0_0 = arith.constant 0 : index
    %0 = vector.load %arg0[%c0, %c0_0] : memref<16x128xf32, #tpu.memory_space<vmem>>, vector<16x128xf32>
    %c448 = arith.constant 448 : index
    %c0_1 = arith.constant 0 : index
    %1 = vector.load %arg1[%c448, %c0_1] : memref<648x128xf32, #tpu.memory_space<vmem>>, vector<8x128xf32>
    %2 = vector.extract_strided_slice %1 {offsets = [0, 0], sizes = [1, 128], strides = [1, 1]} : vector<8x128xf32> to vector<1x128xf32>
    %3 = vector.extract_strided_slice %1 {offsets = [1, 0], sizes = [1, 128], strides = [1, 1]} : vector<8x128xf32> to vector<1x128xf32>
    %4 = vector.extract_strided_slice %1 {offsets = [2, 0], sizes = [1, 128], strides = [1, 1]} : vector<8x128xf32> to vector<1x128xf32>
    %5 = vector.extract_strided_slice %1 {offsets = [3, 0], sizes = [1, 128], strides = [1, 1]} : vector<8x128xf32> to vector<1x128xf32>
    %6 = vector.extract_strided_slice %1 {offsets = [4, 0], sizes = [1, 128], strides = [1, 1]} : vector<8x128xf32> to vector<1x128xf32>
    %7 = vector.extract_strided_slice %1 {offsets = [5, 0], sizes = [1, 128], strides = [1, 1]} : vector<8x128xf32> to vector<1x128xf32>
    %8 = vector.extract_strided_slice %0 {offsets = [0, 0], sizes = [16, 32], strides = [1, 1]} : vector<16x128xf32> to vector<16x32xf32>
    %cst = arith.constant dense<0.000000e+00> : vector<16xf32>
    %9 = vector.multi_reduction <add>, %8, %cst [1] : vector<16x32xf32> to vector<16xf32>
    %10 = vector.shape_cast %9 : vector<16xf32> to vector<16x1xf32>
    %cst_2 = arith.constant 3.200000e+01 : f32
    %11 = vector.broadcast %cst_2 : f32 to vector<16x1xf32>
    %12 = arith.divf %10, %11 : vector<16x1xf32>
    %13 = vector.broadcast %12 : vector<16x1xf32> to vector<16x32xf32>
    %14 = arith.subf %8, %13 : vector<16x32xf32>
    %15 = arith.mulf %14, %14 : vector<16x32xf32>
    %cst_3 = arith.constant dense<0.000000e+00> : vector<16xf32>
    %16 = vector.multi_reduction <add>, %15, %cst_3 [1] : vector<16x32xf32> to vector<16xf32>
    %17 = vector.shape_cast %16 : vector<16xf32> to vector<16x1xf32>
    %cst_4 = arith.constant 3.200000e+01 : f32
    %18 = vector.broadcast %cst_4 : f32 to vector<16x1xf32>
    %19 = arith.divf %17, %18 : vector<16x1xf32>
    %cst_5 = arith.constant 9.99999974E-6 : f32
    %20 = vector.broadcast %cst_5 : f32 to vector<16x1xf32>
    %21 = arith.addf %19, %20 : vector<16x1xf32>
    %22 = math.rsqrt %21 : vector<16x1xf32>
    %23 = vector.broadcast %22 : vector<16x1xf32> to vector<16x32xf32>
    %24 = arith.mulf %14, %23 : vector<16x32xf32>
    %c0_6 = arith.constant 0 : index
    %c0_7 = arith.constant 0 : index
    %25 = vector.load %arg1[%c0_6, %c0_7] : memref<648x128xf32, #tpu.memory_space<vmem>>, vector<32x128xf32>
    %cst_8 = arith.constant dense<0.000000e+00> : vector<16x128xf32>
    %26 = tpu.matmul %24, %25, %cst_8 {dimension_numbers = #tpu.dot_dimension_numbers<[1], [0], [0], [1], [0, 0, 1, 1], [], []>} : vector<16x32xf32>, vector<32x128xf32>, vector<16x128xf32> -> vector<16x128xf32>
    %27 = vector.broadcast %2 : vector<1x128xf32> to vector<16x128xf32>
    %28 = arith.addf %26, %27 : vector<16x128xf32>
    %c32 = arith.constant 32 : index
    %c0_9 = arith.constant 0 : index
    %29 = vector.load %arg1[%c32, %c0_9] : memref<648x128xf32, #tpu.memory_space<vmem>>, vector<128x128xf32>
    %cst_10 = arith.constant dense<0.000000e+00> : vector<16x128xf32>
    %30 = tpu.matmul %28, %29, %cst_10 {dimension_numbers = #tpu.dot_dimension_numbers<[1], [0], [0], [1], [0, 0, 1, 1], [], []>} : vector<16x128xf32>, vector<128x128xf32>, vector<16x128xf32> -> vector<16x128xf32>
    %31 = vector.broadcast %3 : vector<1x128xf32> to vector<16x128xf32>
    %32 = arith.addf %30, %31 : vector<16x128xf32>
    %c456 = arith.constant 456 : index
    %c0_11 = arith.constant 0 : index
    %33 = vector.load %arg1[%c456, %c0_11] : memref<648x128xf32, #tpu.memory_space<vmem>>, vector<64x128xf32>
    %c520 = arith.constant 520 : index
    %c0_12 = arith.constant 0 : index
    %34 = vector.load %arg1[%c520, %c0_12] : memref<648x128xf32, #tpu.memory_space<vmem>>, vector<64x128xf32>
    %c584 = arith.constant 584 : index
    %c0_13 = arith.constant 0 : index
    %35 = vector.load %arg1[%c584, %c0_13] : memref<648x128xf32, #tpu.memory_space<vmem>>, vector<64x16xf32>
    %36 = tpu.concatenate %28, %28, %28, %28 in 0 : vector<16x128xf32>, vector<16x128xf32>, vector<16x128xf32>, vector<16x128xf32> -> vector<64x128xf32>
    %37 = arith.mulf %36, %33 : vector<64x128xf32>
    %cst_14 = arith.constant dense<0.000000e+00> : vector<64x16xf32>
    %38 = tpu.matmul %37, %32, %cst_14 {dimension_numbers = #tpu.dot_dimension_numbers<[1], [1], [0], [0], [0, 0, 1, 0], [], []>} : vector<64x128xf32>, vector<16x128xf32>, vector<64x16xf32> -> vector<64x16xf32>
    %39 = arith.addf %38, %35 : vector<64x16xf32>
    %cst_15 = arith.constant dense<0xFF800000> : vector<64xf32>
    %40 = vector.multi_reduction <maximumf>, %39, %cst_15 [1] : vector<64x16xf32> to vector<64xf32>
    %41 = vector.shape_cast %40 : vector<64xf32> to vector<64x1xf32>
    %42 = vector.broadcast %41 : vector<64x1xf32> to vector<64x16xf32>
    %43 = arith.subf %39, %42 : vector<64x16xf32>
    %44 = math.exp %43 : vector<64x16xf32>
    %cst_16 = arith.constant dense<0.000000e+00> : vector<64xf32>
    %45 = vector.multi_reduction <add>, %44, %cst_16 [1] : vector<64x16xf32> to vector<64xf32>
    %46 = vector.shape_cast %45 : vector<64xf32> to vector<64x1xf32>
    %47 = tpu.reciprocal %46 {approx = true} : vector<64x1xf32> -> vector<64x1xf32>
    %48 = vector.broadcast %47 : vector<64x1xf32> to vector<64x16xf32>
    %49 = arith.mulf %44, %48 : vector<64x16xf32>
    %cst_17 = arith.constant dense<0.000000e+00> : vector<64x128xf32>
    %50 = tpu.matmul %49, %32, %cst_17 {dimension_numbers = #tpu.dot_dimension_numbers<[1], [0], [0], [1], [0, 0, 1, 1], [], []>} : vector<64x16xf32>, vector<16x128xf32>, vector<64x128xf32> -> vector<64x128xf32>
    %51 = arith.mulf %50, %34 : vector<64x128xf32>
    %52 = vector.extract_strided_slice %51 {offsets = [0, 0], sizes = [16, 128], strides = [1, 1]} : vector<64x128xf32> to vector<16x128xf32>
    %53 = vector.extract_strided_slice %51 {offsets = [16, 0], sizes = [16, 128], strides = [1, 1]} : vector<64x128xf32> to vector<16x128xf32>
    %54 = arith.addf %52, %53 : vector<16x128xf32>
    %55 = vector.extract_strided_slice %51 {offsets = [32, 0], sizes = [16, 128], strides = [1, 1]} : vector<64x128xf32> to vector<16x128xf32>
    %56 = arith.addf %54, %55 : vector<16x128xf32>
    %57 = vector.extract_strided_slice %51 {offsets = [48, 0], sizes = [16, 128], strides = [1, 1]} : vector<64x128xf32> to vector<16x128xf32>
    %58 = arith.addf %56, %57 : vector<16x128xf32>
    %c160 = arith.constant 160 : index
    %c0_18 = arith.constant 0 : index
    %59 = vector.load %arg1[%c160, %c0_18] : memref<648x128xf32, #tpu.memory_space<vmem>>, vector<128x128xf32>
    %cst_19 = arith.constant dense<0.000000e+00> : vector<16x128xf32>
    %60 = tpu.matmul %58, %59, %cst_19 {dimension_numbers = #tpu.dot_dimension_numbers<[1], [0], [0], [1], [0, 0, 1, 1], [], []>} : vector<16x128xf32>, vector<128x128xf32>, vector<16x128xf32> -> vector<16x128xf32>
    %61 = vector.broadcast %4 : vector<1x128xf32> to vector<16x128xf32>
    %62 = arith.addf %60, %61 : vector<16x128xf32>
    %63 = arith.addf %0, %62 : vector<16x128xf32>
    %64 = vector.extract_strided_slice %63 {offsets = [0, 0], sizes = [16, 32], strides = [1, 1]} : vector<16x128xf32> to vector<16x32xf32>
    %cst_20 = arith.constant dense<0.000000e+00> : vector<16xf32>
    %65 = vector.multi_reduction <add>, %64, %cst_20 [1] : vector<16x32xf32> to vector<16xf32>
    %66 = vector.shape_cast %65 : vector<16xf32> to vector<16x1xf32>
    %cst_21 = arith.constant 3.200000e+01 : f32
    %67 = vector.broadcast %cst_21 : f32 to vector<16x1xf32>
    %68 = arith.divf %66, %67 : vector<16x1xf32>
    %69 = vector.broadcast %68 : vector<16x1xf32> to vector<16x32xf32>
    %70 = arith.subf %64, %69 : vector<16x32xf32>
    %71 = arith.mulf %70, %70 : vector<16x32xf32>
    %cst_22 = arith.constant dense<0.000000e+00> : vector<16xf32>
    %72 = vector.multi_reduction <add>, %71, %cst_22 [1] : vector<16x32xf32> to vector<16xf32>
    %73 = vector.shape_cast %72 : vector<16xf32> to vector<16x1xf32>
    %cst_23 = arith.constant 3.200000e+01 : f32
    %74 = vector.broadcast %cst_23 : f32 to vector<16x1xf32>
    %75 = arith.divf %73, %74 : vector<16x1xf32>
    %cst_24 = arith.constant 9.99999974E-6 : f32
    %76 = vector.broadcast %cst_24 : f32 to vector<16x1xf32>
    %77 = arith.addf %75, %76 : vector<16x1xf32>
    %78 = math.rsqrt %77 : vector<16x1xf32>
    %79 = vector.broadcast %78 : vector<16x1xf32> to vector<16x32xf32>
    %80 = arith.mulf %70, %79 : vector<16x32xf32>
    %c288 = arith.constant 288 : index
    %c0_25 = arith.constant 0 : index
    %81 = vector.load %arg1[%c288, %c0_25] : memref<648x128xf32, #tpu.memory_space<vmem>>, vector<32x128xf32>
    %cst_26 = arith.constant dense<0.000000e+00> : vector<16x128xf32>
    %82 = tpu.matmul %80, %81, %cst_26 {dimension_numbers = #tpu.dot_dimension_numbers<[1], [0], [0], [1], [0, 0, 1, 1], [], []>} : vector<16x32xf32>, vector<32x128xf32>, vector<16x128xf32> -> vector<16x128xf32>
    %83 = vector.broadcast %5 : vector<1x128xf32> to vector<16x128xf32>
    %84 = arith.addf %82, %83 : vector<16x128xf32>
    %cst_27 = arith.constant 5.000000e-01 : f32
    %85 = vector.broadcast %cst_27 : f32 to vector<16x128xf32>
    %86 = arith.mulf %85, %84 : vector<16x128xf32>
    %cst_28 = arith.constant 4.471500e-02 : f32
    %87 = vector.broadcast %cst_28 : f32 to vector<16x128xf32>
    %88 = arith.mulf %87, %84 : vector<16x128xf32>
    %89 = arith.mulf %88, %84 : vector<16x128xf32>
    %90 = arith.mulf %89, %84 : vector<16x128xf32>
    %91 = arith.addf %84, %90 : vector<16x128xf32>
    %cst_29 = arith.constant 0.797884583 : f32
    %92 = vector.broadcast %cst_29 : f32 to vector<16x128xf32>
    %93 = arith.mulf %92, %91 : vector<16x128xf32>
    %94 = math.tanh %93 : vector<16x128xf32>
    %cst_30 = arith.constant 1.000000e+00 : f32
    %95 = vector.broadcast %cst_30 : f32 to vector<16x128xf32>
    %96 = arith.addf %95, %94 : vector<16x128xf32>
    %97 = arith.mulf %86, %96 : vector<16x128xf32>
    %c320 = arith.constant 320 : index
    %c0_31 = arith.constant 0 : index
    %98 = vector.load %arg1[%c320, %c0_31] : memref<648x128xf32, #tpu.memory_space<vmem>>, vector<128x128xf32>
    %cst_32 = arith.constant dense<0.000000e+00> : vector<16x128xf32>
    %99 = tpu.matmul %97, %98, %cst_32 {dimension_numbers = #tpu.dot_dimension_numbers<[1], [0], [0], [1], [0, 0, 1, 1], [], []>} : vector<16x128xf32>, vector<128x128xf32>, vector<16x128xf32> -> vector<16x128xf32>
    %100 = vector.broadcast %6 : vector<1x128xf32> to vector<16x128xf32>
    %101 = arith.addf %99, %100 : vector<16x128xf32>
    %102 = arith.addf %63, %101 : vector<16x128xf32>
    %103 = vector.broadcast %7 : vector<1x128xf32> to vector<16x128xf32>
    %104 = arith.mulf %28, %103 : vector<16x128xf32>
    %105 = arith.addf %102, %104 : vector<16x128xf32>
    %c0_33 = arith.constant 0 : index
    %c0_34 = arith.constant 0 : index
    %106 = vector.load %arg2[%c0_33, %c0_34] : memref<16x128xf32, #tpu.memory_space<vmem>>, vector<16x128xf32>
    tpu.vector_store %arg2[%c0_33, %c0_34], %105 {strides = array<i32>} : memref<16x128xf32, #tpu.memory_space<vmem>>, vector<16x128xf32>,
    return
  }
}

</mosaic_0001>

<llo_original>
// kernel: tpu_custom_call.1
$region0: #{tpu_custom_call.1}
  #allocation0 [shape = 'u32[]', space=smem, size = 0x4, offset = 0x4, fixed_abs, tag = 'smem constant byte address 0x4 - core index']
  #allocation1 [shape = 'u32[144,128]{1,0:T(1,128)}', space=vmem, size = 0x12000, scoped, tag = 'internal scratch']
  %s0 = inlined_call_operand.hbm [shape: f32[16,128], index: 0, kind: input, shape index: {}]
  %s1 = inlined_call_operand.hbm [shape: f32[648,128], index: 1, kind: input, shape index: {}]
  %s2 = inlined_call_operand.hbm [shape: f32[16,128], index: 2, kind: output, shape index: {}]
  %s3 = sld [smem:[#allocation0]]
  $region26: #{tpu_custom_call.1} parent=0
    _
  %s5 = ssub.s32 1, %s3
  %s6 = scalar_select 0, %s5, %s3
  $region1: #{tpu_custom_call.1} parent=0
    #allocation2 [shape = 'u8[8192]{0}', space=vmem, size = 0x2000, scoped, tag = 'input window, operand 0, single buffered']
    #allocation3 [shape = 's32[1]{0}', space=sflag, size = 0x4, scoped, tag = 'scoped memory for tpu_custom_call.1']
    #allocation4 [shape = 's32[1]{0}', space=sflag, size = 0x4, scoped, tag = 'scoped memory for tpu_custom_call.1']
    #allocation5 [shape = 'u8[331776]{0}', space=vmem, size = 0x51000, scoped, tag = 'input window, operand 1, single buffered']
    #allocation6 [shape = 's32[1]{0}', space=sflag, size = 0x4, scoped, tag = 'scoped memory for tpu_custom_call.1']
    #allocation7 [shape = 'u8[8192]{0}', space=vmem, size = 0x2000, scoped, tag = 'output window, operand 0, single buffered']
    %7 = vsyncpa [#allocation3], 0
    %8 = vsyncpa [#allocation6], 0
    %9 = vsyncpa [#allocation4], 0
    // Predicated region
    $region2: #{tpu_custom_call.1} parent=1 // pred_check
      _
    $region3: #{tpu_custom_call.1} parent=1 // pred_check_branch
      %11 = sbr.rel (0) target = $region5
    $region4: #{tpu_custom_call.1} parent=1 // pred_region
      %s13 = ssub.s32 256, 256
      %14 = vsyncadd [#allocation3], %s13
      %s15 = sshll.u32 [#allocation2], 4
      %s16 = int_to_ptr.vmem [resolvable:$true] %s15
      %21 = dma.hbm_to_vmem [thread:$0]  %s0, 256, %s16, [#allocation3], 128, 128, 8
    $region5: #{tpu_custom_call.1} parent=1 // pred_fallthru
      _
    // Predicated region
    $region6: #{tpu_custom_call.1} parent=1 // pred_check
      _
    $region7: #{tpu_custom_call.1} parent=1 // pred_check_branch
      %23 = sbr.rel (0) target = $region9
    $region8: #{tpu_custom_call.1} parent=1 // pred_region
      %s25 = ssub.s32 10368, 10368
      %26 = vsyncadd [#allocation6], %s25
      %s27 = sshll.u32 [#allocation5], 4
      %s28 = int_to_ptr.vmem [resolvable:$true] %s27
      %33 = dma.hbm_to_vmem [thread:$0]  %s1, 10368, %s28, [#allocation6], 128, 128, 8
    $region9: #{tpu_custom_call.1} parent=1 // pred_fallthru
      _
    // Predicated region
    $region10: #{tpu_custom_call.1} parent=1 // pred_check
      _
    $region11: #{tpu_custom_call.1} parent=1 // pred_check_branch
      %35 = sbr.rel (0) target = $region13
    $region12: #{tpu_custom_call.1} parent=1 // pred_region
      %36 = dma.done [#allocation3], 256
    $region13: #{tpu_custom_call.1} parent=1 // pred_fallthru
      _
    // Predicated region
    $region14: #{tpu_custom_call.1} parent=1 // pred_check
      _
    $region15: #{tpu_custom_call.1} parent=1 // pred_check_branch
      %38 = sbr.rel (0) target = $region17
    $region16: #{tpu_custom_call.1} parent=1 // pred_region
      %39 = dma.done [#allocation6], 10368
    $region17: #{tpu_custom_call.1} parent=1 // pred_fallthru
      _
    %v40 = vld [vmem:[#allocation2] sm:$0xff]
    %v41 = vld [vmem:[#allocation2 + $0x8] sm:$0xff]
    %v42 = vld [vmem:[#allocation5 + $0x1c0] sm:$0xff]
    %vm43 = vcmask 261120
    %v44 = vsel %vm43, %v40, 0.0
    %45 = vadd.xlane.f32.xlu0 %v44
    %v46 = vpop.xlane.xlu0 %45
    %v47 = vsel %vm43, %v41, 0.0
    %48 = vadd.xlane.f32.xlu0 %v47
    %v49 = vpop.xlane.xlu0 %48
    %v50 = vrcp.pop 32.0
    %v51 = vmul.f32 %v46, %v50
    %v52 = vmul.f32 %v49, %v50
    %v53 = vsub.f32 %v40, %v51
    %v54 = vsub.f32 %v41, %v52
    %v55 = vmul.f32 %v53, %v53
    %v56 = vmul.f32 %v54, %v54
    %v57 = vsel %vm43, %v55, 0.0
    %58 = vadd.xlane.f32.xlu0 %v57
    %v59 = vpop.xlane.xlu0 %58
    %v60 = vsel %vm43, %v56, 0.0
    %61 = vadd.xlane.f32.xlu0 %v60
    %v62 = vpop.xlane.xlu0 %61
    %v63 = vmul.f32 %v59, %v50
    %v64 = vmul.f32 %v62, %v50
    %v65 = vadd.f32 %v63, 1e-05
    %v66 = vadd.f32 %v64, 1e-05
    %v67 = vrsqrt.pop %v65
    %v68 = vrsqrt.pop %v66
    %v69 = vmul.f32 %v53, %v67
    %v70 = vmul.f32 %v54, %v68
    %v71 = vld [vmem:[#allocation5] sm:$0xff]
    %v72 = vld [vmem:[#allocation5 + $0x8] sm:$0xff]
    %v73 = vld [vmem:[#allocation5 + $0x10] sm:$0xff]
    %v74 = vld [vmem:[#allocation5 + $0x18] sm:$0xff]
    %v75 = vlaneseq
    %v76 = vshrl.u32 %v75, 7
    %v77 = vsub.s32 0, %v76
    %v78 = vrot.slane %v42, %v77
    %v80 = vsel %vm43, %v69, 0
    %v83 = vsel %vm43, %v70, 0
    %85 = vmatprep.subr.mxu0 0.0
    %86 = vmatpush1.msra.mxu0 %v71
    %87 = vmatprep.subr.mxu0 0.0
    %88 = vmatpush1.msra.mxu0 %v72
    %89 = vmatprep.subr.mxu0 0.0
    %90 = vmatpush1.msra.mxu0 %v73
    %91 = vmatprep.subr.mxu0 0.0
    %92 = vmatpush1.msra.mxu0 %v74
    %93 = vmatprep.subr.mxu0 0.0
    %94 = vmatpush1.msra.mxu0 0.0
    %95 = vmatprep.subr.mxu0 0.0
    %96 = vmatpush1.msra.mxu0 0.0
    %97 = vmatprep.subr.mxu0 0.0
    %98 = vmatpush1.msra.mxu0 0.0
    %99 = vmatprep.subr.mxu0 0.0
    %100 = vmatpush1.msra.mxu0 0.0
    %101 = vmatprep.subr.mxu0 0.0
    %102 = vmatpush1.msra.mxu0 0.0
    %103 = vmatprep.subr.mxu0 0.0
    %104 = vmatpush1.msra.mxu0 0.0
    %105 = vmatprep.subr.mxu0 0.0
    %106 = vmatpush1.msra.mxu0 0.0
    %107 = vmatprep.subr.mxu0 0.0
    %108 = vmatpush1.msra.mxu0 0.0
    %109 = vmatprep.subr.mxu0 0.0
    %110 = vmatpush1.msra.mxu0 0.0
    %111 = vmatprep.subr.mxu0 0.0
    %112 = vmatpush1.msra.mxu0 0.0
    %113 = vmatprep.subr.mxu0 0.0
    %114 = vmatpush1.msra.mxu0 0.0
    %115 = vmatprep.subr.mxu0 0.0
    %116 = vmatpush1.msra.mxu0 0.0
    %117 = vmatprep.subr.mxu0 0.0
    %118 = vmatpush1.msra.mxu0 0.0
    %119 = vmatprep.subr.mxu0 0.0
    %120 = vmatpush1.msra.mxu0 0.0
    %121 = vmatprep.subr.mxu0 0.0
    %122 = vmatpush1.msra.mxu0 0.0
    %123 = vmatprep.subr.mxu0 0.0
    %124 = vmatpush1.msra.mxu0 0.0
    %125 = vmatprep.subr.mxu0 0.0
    %126 = vmatpush1.msra.mxu0 0.0
    %127 = vmatprep.subr.mxu0 0.0
    %128 = vmatpush1.msra.mxu0 0.0
    %129 = vmatprep.subr.mxu0 0.0
    %130 = vmatpush1.msra.mxu0 0.0
    %131 = vmatprep.subr.mxu0 0.0
    %132 = vmatpush1.msra.mxu0 0.0
    %133 = vmatprep.subr.mxu0 0.0
    %134 = vmatpush1.msra.mxu0 0.0
    %135 = vmatprep.subr.mxu0 0.0
    %136 = vmatpush1.msra.mxu0 0.0
    %137 = vmatprep.subr.mxu0 0.0
    %138 = vmatpush1.msra.mxu0 0.0
    %139 = vmatprep.subr.mxu0 0.0
    %140 = vmatpush1.msra.mxu0 0.0
    %141 = vmatprep.subr.mxu0 0.0
    %142 = vmatpush1.msra.mxu0 0.0
    %143 = vmatprep.subr.mxu0 0.0
    %144 = vmatpush1.msra.mxu0 0.0
    %145 = vmatprep.subr.mxu0 0.0
    %146 = vmatpush1.msra.mxu0 0.0
    %147 = vmatprep.subr.mxu0 0.0
    %148 = vmatpush1.msra.mxu0 0.0
    %149 = vmatprep.mubr.f32.mxu0 0.0
    %150 = vmatmul.mubr.f32.gmra.mrb[0].mxu0 %v80
    %v151 = vpop.f32.mrb[0].mxu0
    %v152 = vadd.f32 %v78, %v151
    %v153 = vpop.f32.mrb[0].mxu0
    %154 = vmatprep.mubr.f32.mxu0 0.0
    %155 = vmatmul.mubr.f32.gmra.mrb[0].mxu0 %v83
    %v156 = vpop.f32.mrb[0].mxu0
    %v157 = vadd.f32 %v78, %v156
    %v158 = vpop.f32.mrb[0].mxu0
    %159 = vdwg.mxu0
    %v160 = vld [vmem:[#allocation5 + $0x20] sm:$0xff]
    %v161 = vld [vmem:[#allocation5 + $0x28] sm:$0xff]
    %v162 = vld [vmem:[#allocation5 + $0x30] sm:$0xff]
    %v163 = vld [vmem:[#allocation5 + $0x38] sm:$0xff]
    %v164 = vld [vmem:[#allocation5 + $0x40] sm:$0xff]
    %v165 = vld [vmem:[#allocation5 + $0x48] sm:$0xff]
    %v166 = vld [vmem:[#allocation5 + $0x50] sm:$0xff]
    %v167 = vld [vmem:[#allocation5 + $0x58] sm:$0xff]
    %v168 = vld [vmem:[#allocation5 + $0x60] sm:$0xff]
    %v169 = vld [vmem:[#allocation5 + $0x68] sm:$0xff]
    %v170 = vld [vmem:[#allocation5 + $0x70] sm:$0xff]
    %v171 = vld [vmem:[#allocation5 + $0x78] sm:$0xff]
    %v172 = vld [vmem:[#allocation5 + $0x80] sm:$0xff]
    %v173 = vld [vmem:[#allocation5 + $0x88] sm:$0xff]
    %v174 = vld [vmem:[#allocation5 + $0x90] sm:$0xff]
    %v175 = vld [vmem:[#allocation5 + $0x98] sm:$0xff]
    %v176 = vlaneseq
    %v177 = vshrl.u32 %v176, 7
    %v178 = vsub.s32 1, %v177
    %v179 = vrot.slane %v42, %v178
    %180 = vmatprep.subr.mxu0 0.0
    %181 = vmatpush1.msra.mxu0 %v160
    %182 = vmatprep.subr.mxu0 0.0
    %183 = vmatpush1.msra.mxu0 %v161
    %184 = vmatprep.subr.mxu0 0.0
    %185 = vmatpush1.msra.mxu0 %v162
    %186 = vmatprep.subr.mxu0 0.0
    %187 = vmatpush1.msra.mxu0 %v163
    %188 = vmatprep.subr.mxu0 0.0
    %189 = vmatpush1.msra.mxu0 %v164
    %190 = vmatprep.subr.mxu0 0.0
    %191 = vmatpush1.msra.mxu0 %v165
    %192 = vmatprep.subr.mxu0 0.0
    %193 = vmatpush1.msra.mxu0 %v166
    %194 = vmatprep.subr.mxu0 0.0
    %195 = vmatpush1.msra.mxu0 %v167
    %196 = vmatprep.subr.mxu0 0.0
    %197 = vmatpush1.msra.mxu0 %v168
    %198 = vmatprep.subr.mxu0 0.0
    %199 = vmatpush1.msra.mxu0 %v169
    %200 = vmatprep.subr.mxu0 0.0
    %201 = vmatpush1.msra.mxu0 %v170
    %202 = vmatprep.subr.mxu0 0.0
    %203 = vmatpush1.msra.mxu0 %v171
    %204 = vmatprep.subr.mxu0 0.0
    %205 = vmatpush1.msra.mxu0 %v172
    %206 = vmatprep.subr.mxu0 0.0
    %207 = vmatpush1.msra.mxu0 %v173
    %208 = vmatprep.subr.mxu0 0.0
    %209 = vmatpush1.msra.mxu0 %v174
    %210 = vmatprep.subr.mxu0 0.0
    %211 = vmatpush1.msra.mxu0 %v175
    %212 = vmatprep.subr.mxu0 0.0
    %213 = vmatpush1.msra.mxu0 0.0
    %214 = vmatprep.subr.mxu0 0.0
    %215 = vmatpush1.msra.mxu0 0.0
    %216 = vmatprep.subr.mxu0 0.0
    %217 = vmatpush1.msra.mxu0 0.0
    %218 = vmatprep.subr.mxu0 0.0
    %219 = vmatpush1.msra.mxu0 0.0
    %220 = vmatprep.subr.mxu0 0.0
    %221 = vmatpush1.msra.mxu0 0.0
    %222 = vmatprep.subr.mxu0 0.0
    %223 = vmatpush1.msra.mxu0 0.0
    %224 = vmatprep.subr.mxu0 0.0
    %225 = vmatpush1.msra.mxu0 0.0
    %226 = vmatprep.subr.mxu0 0.0
    %227 = vmatpush1.msra.mxu0 0.0
    %228 = vmatprep.subr.mxu0 0.0
    %229 = vmatpush1.msra.mxu0 0.0
    %230 = vmatprep.subr.mxu0 0.0
    %231 = vmatpush1.msra.mxu0 0.0
    %232 = vmatprep.subr.mxu0 0.0
    %233 = vmatpush1.msra.mxu0 0.0
    %234 = vmatprep.subr.mxu0 0.0
    %235 = vmatpush1.msra.mxu0 0.0
    %236 = vmatprep.subr.mxu0 0.0
    %237 = vmatpush1.msra.mxu0 0.0
    %238 = vmatprep.subr.mxu0 0.0
    %239 = vmatpush1.msra.mxu0 0.0
    %240 = vmatprep.subr.mxu0 0.0
    %241 = vmatpush1.msra.mxu0 0.0
    %242 = vmatprep.subr.mxu0 0.0
    %243 = vmatpush1.msra.mxu0 0.0
    %244 = vmatprep.mubr.f32.mxu0 0.0
    %245 = vmatmul.mubr.f32.gmra.mrb[0].mxu0 %v152
    %v246 = vpop.f32.mrb[0].mxu0
    %v247 = vadd.f32 %v179, %v246
    %v248 = vpop.f32.mrb[0].mxu0
    %249 = vmatprep.mubr.f32.mxu0 0.0
    %250 = vmatmul.mubr.f32.gmra.mrb[0].mxu0 %v157
    %v251 = vpop.f32.mrb[0].mxu0
    %v252 = vadd.f32 %v179, %v251
    %v253 = vpop.f32.mrb[0].mxu0
    %254 = vdwg.mxu0
    %v255 = vld [vmem:[#allocation5 + $0x1c8] sm:$0xff]
    %v256 = vld [vmem:[#allocation5 + $0x1d0] sm:$0xff]
    %v257 = vld [vmem:[#allocation5 + $0x1d8] sm:$0xff]
    %v258 = vld [vmem:[#allocation5 + $0x1e0] sm:$0xff]
    %v259 = vld [vmem:[#allocation5 + $0x1e8] sm:$0xff]
    %v260 = vld [vmem:[#allocation5 + $0x1f0] sm:$0xff]
    %v261 = vld [vmem:[#allocation5 + $0x1f8] sm:$0xff]
    %v262 = vld [vmem:[#allocation5 + $0x200] sm:$0xff]
    %v263 = vld [vmem:[#allocation5 + $0x208] sm:$0xff]
    %v264 = vld [vmem:[#allocation5 + $0x210] sm:$0xff]
    %v265 = vld [vmem:[#allocation5 + $0x218] sm:$0xff]
    %v266 = vld [vmem:[#allocation5 + $0x220] sm:$0xff]
    %v267 = vld [vmem:[#allocation5 + $0x228] sm:$0xff]
    %v268 = vld [vmem:[#allocation5 + $0x230] sm:$0xff]
    %v269 = vld [vmem:[#allocation5 + $0x238] sm:$0xff]
    %v270 = vld [vmem:[#allocation5 + $0x240] sm:$0xff]
    %v271 = vld [vmem:[#allocation5 + $0x248] sm:$0xff]
    %v272 = vld [vmem:[#allocation5 + $0x250] sm:$0xff]
    %v273 = vld [vmem:[#allocation5 + $0x258] sm:$0xff]
    %v274 = vld [vmem:[#allocation5 + $0x260] sm:$0xff]
    %v275 = vld [vmem:[#allocation5 + $0x268] sm:$0xff]
    %v276 = vld [vmem:[#allocation5 + $0x270] sm:$0xff]
    %v277 = vld [vmem:[#allocation5 + $0x278] sm:$0xff]
    %v278 = vld [vmem:[#allocation5 + $0x280] sm:$0xff]
    %v279 = vmul.f32 %v152, %v255
    %v280 = vmul.f32 %v157, %v256
    %v281 = vmul.f32 %v152, %v257
    %v282 = vmul.f32 %v157, %v258
    %v283 = vmul.f32 %v152, %v259
    %v284 = vmul.f32 %v157, %v260
    %v285 = vmul.f32 %v152, %v261
    %v286 = vmul.f32 %v157, %v262
    %287 = vmatprep.subr.mxu0 0.0
    %288 = vmatpush1.xpose.msra.mxu0 %v247
    %289 = vmatprep.subr.mxu0 0.0
    %290 = vmatpush1.xpose.msra.mxu0 %v252
    %291 = vmatprep.subr.mxu0 0.0
    %292 = vmatpush1.xpose.msra.mxu0 0.0
    %293 = vmatprep.subr.mxu0 0.0
    %294 = vmatpush1.xpose.msra.mxu0 0.0
    %295 = vmatprep.subr.mxu0 0.0
    %296 = vmatpush1.xpose.msra.mxu0 0.0
    %297 = vmatprep.subr.mxu0 0.0
    %298 = vmatpush1.xpose.msra.mxu0 0.0
    %299 = vmatprep.subr.mxu0 0.0
    %300 = vmatpush1.xpose.msra.mxu0 0.0
    %301 = vmatprep.subr.mxu0 0.0
    %302 = vmatpush1.xpose.msra.mxu0 0.0
    %303 = vmatprep.subr.mxu0 0.0
    %304 = vmatpush1.xpose.msra.mxu0 0.0
    %305 = vmatprep.subr.mxu0 0.0
    %306 = vmatpush1.xpose.msra.mxu0 0.0
    %307 = vmatprep.subr.mxu0 0.0
    %308 = vmatpush1.xpose.msra.mxu0 0.0
    %309 = vmatprep.subr.mxu0 0.0
    %310 = vmatpush1.xpose.msra.mxu0 0.0
    %311 = vmatprep.subr.mxu0 0.0
    %312 = vmatpush1.xpose.msra.mxu0 0.0
    %313 = vmatprep.subr.mxu0 0.0
    %314 = vmatpush1.xpose.msra.mxu0 0.0
    %315 = vmatprep.subr.mxu0 0.0
    %316 = vmatpush1.xpose.msra.mxu0 0.0
    %317 = vmatprep.subr.mxu0 0.0
    %318 = vmatpush1.xpose.msra.mxu0 0.0
    %319 = vmatprep.subr.mxu0 0.0
    %320 = vmatpush1.xpose.msra.mxu0 0.0
    %321 = vmatprep.subr.mxu0 0.0
    %322 = vmatpush1.xpose.msra.mxu0 0.0
    %323 = vmatprep.subr.mxu0 0.0
    %324 = vmatpush1.xpose.msra.mxu0 0.0
    %325 = vmatprep.subr.mxu0 0.0
    %326 = vmatpush1.xpose.msra.mxu0 0.0
    %327 = vmatprep.subr.mxu0 0.0
    %328 = vmatpush1.xpose.msra.mxu0 0.0
    %329 = vmatprep.subr.mxu0 0.0
    %330 = vmatpush1.xpose.msra.mxu0 0.0
    %331 = vmatprep.subr.mxu0 0.0
    %332 = vmatpush1.xpose.msra.mxu0 0.0
    %333 = vmatprep.subr.mxu0 0.0
    %334 = vmatpush1.xpose.msra.mxu0 0.0
    %335 = vmatprep.subr.mxu0 0.0
    %336 = vmatpush1.xpose.msra.mxu0 0.0
    %337 = vmatprep.subr.mxu0 0.0
    %338 = vmatpush1.xpose.msra.mxu0 0.0
    %339 = vmatprep.subr.mxu0 0.0
    %340 = vmatpush1.xpose.msra.mxu0 0.0
    %341 = vmatprep.subr.mxu0 0.0
    %342 = vmatpush1.xpose.msra.mxu0 0.0
    %343 = vmatprep.subr.mxu0 0.0
    %344 = vmatpush1.xpose.msra.mxu0 0.0
    %345 = vmatprep.subr.mxu0 0.0
    %346 = vmatpush1.xpose.msra.mxu0 0.0
    %347 = vmatprep.subr.mxu0 0.0
    %348 = vmatpush1.xpose.msra.mxu0 0.0
    %349 = vmatprep.subr.mxu0 0.0
    %350 = vmatpush1.xpose.msra.mxu0 0.0
    %351 = vmatprep.mubr.f32.mxu0 0.0
    %352 = vmatmul.mubr.f32.gmra.mrb[0].mxu0 %v279
    %v353 = vpop.f32.mrb[0].mxu0
    %v354 = vadd.f32 %v271, %v353
    %v355 = vpop.f32.mrb[0].mxu0
    %356 = vmatprep.mubr.f32.mxu0 0.0
    %357 = vmatmul.mubr.f32.gmra.mrb[0].mxu0 %v280
    %v358 = vpop.f32.mrb[0].mxu0
    %v359 = vadd.f32 %v272, %v358
    %v360 = vpop.f32.mrb[0].mxu0
    %361 = vmatprep.mubr.f32.mxu0 0.0
    %362 = vmatmul.mubr.f32.gmra.mrb[0].mxu0 %v281
    %v363 = vpop.f32.mrb[0].mxu0
    %v364 = vadd.f32 %v273, %v363
    %v365 = vpop.f32.mrb[0].mxu0
    %366 = vmatprep.mubr.f32.mxu0 0.0
    %367 = vmatmul.mubr.f32.gmra.mrb[0].mxu0 %v282
    %v368 = vpop.f32.mrb[0].mxu0
    %v369 = vadd.f32 %v274, %v368
    %v370 = vpop.f32.mrb[0].mxu0
    %371 = vmatprep.mubr.f32.mxu0 0.0
    %372 = vmatmul.mubr.f32.gmra.mrb[0].mxu0 %v283
    %v373 = vpop.f32.mrb[0].mxu0
    %v374 = vadd.f32 %v275, %v373
    %v375 = vpop.f32.mrb[0].mxu0
    %376 = vmatprep.mubr.f32.mxu0 0.0
    %377 = vmatmul.mubr.f32.gmra.mrb[0].mxu0 %v284
    %v378 = vpop.f32.mrb[0].mxu0
    %v379 = vadd.f32 %v276, %v378
    %v380 = vpop.f32.mrb[0].mxu0
    %381 = vmatprep.mubr.f32.mxu0 0.0
    %382 = vmatmul.mubr.f32.gmra.mrb[0].mxu0 %v285
    %v383 = vpop.f32.mrb[0].mxu0
    %v384 = vadd.f32 %v277, %v383
    %v385 = vpop.f32.mrb[0].mxu0
    %386 = vmatprep.mubr.f32.mxu0 0.0
    %387 = vmatmul.mubr.f32.gmra.mrb[0].mxu0 %v286
    %v388 = vpop.f32.mrb[0].mxu0
    %v389 = vadd.f32 %v278, %v388
    %v390 = vpop.f32.mrb[0].mxu0
    %391 = vdwg.mxu0
    %vm392 = vcmask 130048
    %v393 = vsel %vm392, %v354, -inf
    %394 = vmax.xlane.f32.xlu0 %v393
    %v395 = vpop.xlane.xlu0 %394
    %v396 = vsel %vm392, %v359, -inf
    %397 = vmax.xlane.f32.xlu0 %v396
    %v398 = vpop.xlane.xlu0 %397
    %v399 = vsel %vm392, %v364, -inf
    %400 = vmax.xlane.f32.xlu0 %v399
    %v401 = vpop.xlane.xlu0 %400
    %v402 = vsel %vm392, %v369, -inf
    %403 = vmax.xlane.f32.xlu0 %v402
    %v404 = vpop.xlane.xlu0 %403
    %v405 = vsel %vm392, %v374, -inf
    %406 = vmax.xlane.f32.xlu0 %v405
    %v407 = vpop.xlane.xlu0 %406
    %v408 = vsel %vm392, %v379, -inf
    %409 = vmax.xlane.f32.xlu0 %v408
    %v410 = vpop.xlane.xlu0 %409
    %v411 = vsel %vm392, %v384, -inf
    %412 = vmax.xlane.f32.xlu0 %v411
    %v413 = vpop.xlane.xlu0 %412
    %v414 = vsel %vm392, %v389, -inf
    %415 = vmax.xlane.f32.xlu0 %v414
    %v416 = vpop.xlane.xlu0 %415
    %v417 = vsub.f32 %v354, %v395
    %v418 = vsub.f32 %v359, %v398
    %v419 = vsub.f32 %v364, %v401
    %v420 = vsub.f32 %v369, %v404
    %v421 = vsub.f32 %v374, %v407
    %v422 = vsub.f32 %v379, %v410
    %v423 = vsub.f32 %v384, %v413
    %v424 = vsub.f32 %v389, %v416
    %v425 = vmul.f32 %v417, 1.442695
    %v426 = vpow.pop %v425
    %v427 = vmul.f32 %v418, 1.442695
    %v428 = vpow.pop %v427
    %v429 = vmul.f32 %v419, 1.442695
    %v430 = vpow.pop %v429
    %v431 = vmul.f32 %v420, 1.442695
    %v432 = vpow.pop %v431
    %v433 = vmul.f32 %v421, 1.442695
    %v434 = vpow.pop %v433
    %v435 = vmul.f32 %v422, 1.442695
    %v436 = vpow.pop %v435
    %v437 = vmul.f32 %v423, 1.442695
    %v438 = vpow.pop %v437
    %v439 = vmul.f32 %v424, 1.442695
    %v440 = vpow.pop %v439
    %v441 = vsel %vm392, %v426, 0.0
    %442 = vadd.xlane.f32.xlu0 %v441
    %v443 = vpop.xlane.xlu0 %442
    %v444 = vsel %vm392, %v428, 0.0
    %445 = vadd.xlane.f32.xlu0 %v444
    %v446 = vpop.xlane.xlu0 %445
    %v447 = vsel %vm392, %v430, 0.0
    %448 = vadd.xlane.f32.xlu0 %v447
    %v449 = vpop.xlane.xlu0 %448
    %v450 = vsel %vm392, %v432, 0.0
    %451 = vadd.xlane.f32.xlu0 %v450
    %v452 = vpop.xlane.xlu0 %451
    %v453 = vsel %vm392, %v434, 0.0
    %454 = vadd.xlane.f32.xlu0 %v453
    %v455 = vpop.xlane.xlu0 %454
    %v456 = vsel %vm392, %v436, 0.0
    %457 = vadd.xlane.f32.xlu0 %v456
    %v458 = vpop.xlane.xlu0 %457
    %v459 = vsel %vm392, %v438, 0.0
    %460 = vadd.xlane.f32.xlu0 %v459
    %v461 = vpop.xlane.xlu0 %460
    %v462 = vsel %vm392, %v440, 0.0
    %463 = vadd.xlane.f32.xlu0 %v462
    %v464 = vpop.xlane.xlu0 %463
    %v465 = vrcp.pop %v443
    %v466 = vrcp.pop %v446
    %v467 = vrcp.pop %v449
    %v468 = vrcp.pop %v452
    %v469 = vrcp.pop %v455
    %v470 = vrcp.pop %v458
    %v471 = vrcp.pop %v461
    %v472 = vrcp.pop %v464
    %v473 = vmul.f32 %v426, %v465
    %v474 = vmul.f32 %v428, %v466
    %v475 = vmul.f32 %v430, %v467
    %v476 = vmul.f32 %v432, %v468
    %v477 = vmul.f32 %v434, %v469
    %v478 = vmul.f32 %v436, %v470
    %v479 = vmul.f32 %v438, %v471
    %v480 = vmul.f32 %v440, %v472
    %v482 = vsel %vm392, %v473, 0
    %v485 = vsel %vm392, %v474, 0
    %v488 = vsel %vm392, %v475, 0
    %v491 = vsel %vm392, %v476, 0
    %v494 = vsel %vm392, %v477, 0
    %v497 = vsel %vm392, %v478, 0
    %v500 = vsel %vm392, %v479, 0
    %v503 = vsel %vm392, %v480, 0
    %505 = vmatprep.subr.mxu0 0.0
    %506 = vmatpush1.msra.mxu0 %v247
    %507 = vmatprep.subr.mxu0 0.0
    %508 = vmatpush1.msra.mxu0 %v252
    %509 = vmatprep.subr.mxu0 0.0
    %510 = vmatpush1.msra.mxu0 0.0
    %511 = vmatprep.subr.mxu0 0.0
    %512 = vmatpush1.msra.mxu0 0.0
    %513 = vmatprep.subr.mxu0 0.0
    %514 = vmatpush1.msra.mxu0 0.0
    %515 = vmatprep.subr.mxu0 0.0
    %516 = vmatpush1.msra.mxu0 0.0
    %517 = vmatprep.subr.mxu0 0.0
    %518 = vmatpush1.msra.mxu0 0.0
    %519 = vmatprep.subr.mxu0 0.0
    %520 = vmatpush1.msra.mxu0 0.0
    %521 = vmatprep.subr.mxu0 0.0
    %522 = vmatpush1.msra.mxu0 0.0
    %523 = vmatprep.subr.mxu0 0.0
    %524 = vmatpush1.msra.mxu0 0.0
    %525 = vmatprep.subr.mxu0 0.0
    %526 = vmatpush1.msra.mxu0 0.0
    %527 = vmatprep.subr.mxu0 0.0
    %528 = vmatpush1.msra.mxu0 0.0
    %529 = vmatprep.subr.mxu0 0.0
    %530 = vmatpush1.msra.mxu0 0.0
    %531 = vmatprep.subr.mxu0 0.0
    %532 = vmatpush1.msra.mxu0 0.0
    %533 = vmatprep.subr.mxu0 0.0
    %534 = vmatpush1.msra.mxu0 0.0
    %535 = vmatprep.subr.mxu0 0.0
    %536 = vmatpush1.msra.mxu0 0.0
    %537 = vmatprep.subr.mxu0 0.0
    %538 = vmatpush1.msra.mxu0 0.0
    %539 = vmatprep.subr.mxu0 0.0
    %540 = vmatpush1.msra.mxu0 0.0
    %541 = vmatprep.subr.mxu0 0.0
    %542 = vmatpush1.msra.mxu0 0.0
    %543 = vmatprep.subr.mxu0 0.0
    %544 = vmatpush1.msra.mxu0 0.0
    %545 = vmatprep.subr.mxu0 0.0
    %546 = vmatpush1.msra.mxu0 0.0
    %547 = vmatprep.subr.mxu0 0.0
    %548 = vmatpush1.msra.mxu0 0.0
    %549 = vmatprep.subr.mxu0 0.0
    %550 = vmatpush1.msra.mxu0 0.0
    %551 = vmatprep.subr.mxu0 0.0
    %552 = vmatpush1.msra.mxu0 0.0
    %553 = vmatprep.subr.mxu0 0.0
    %554 = vmatpush1.msra.mxu0 0.0
    %555 = vmatprep.subr.mxu0 0.0
    %556 = vmatpush1.msra.mxu0 0.0
    %557 = vmatprep.subr.mxu0 0.0
    %558 = vmatpush1.msra.mxu0 0.0
    %559 = vmatprep.subr.mxu0 0.0
    %560 = vmatpush1.msra.mxu0 0.0
    %561 = vmatprep.subr.mxu0 0.0
    %562 = vmatpush1.msra.mxu0 0.0
    %563 = vmatprep.subr.mxu0 0.0
    %564 = vmatpush1.msra.mxu0 0.0
    %565 = vmatprep.subr.mxu0 0.0
    %566 = vmatpush1.msra.mxu0 0.0
    %567 = vmatprep.subr.mxu0 0.0
    %568 = vmatpush1.msra.mxu0 0.0
    %569 = vmatprep.mubr.f32.mxu0 0.0
    %570 = vmatmul.mubr.f32.gmra.mrb[0].mxu0 %v482
    %v571 = vpop.f32.mrb[0].mxu0
    %v572 = vadd.f32 0.0, %v571
    %v573 = vpop.f32.mrb[0].mxu0
    %574 = vmatprep.mubr.f32.mxu0 0.0
    %575 = vmatmul.mubr.f32.gmra.mrb[0].mxu0 %v485
    %v576 = vpop.f32.mrb[0].mxu0
    %v577 = vadd.f32 0.0, %v576
    %v578 = vpop.f32.mrb[0].mxu0
    %579 = vmatprep.mubr.f32.mxu0 0.0
    %580 = vmatmul.mubr.f32.gmra.mrb[0].mxu0 %v488
    %v581 = vpop.f32.mrb[0].mxu0
    %v582 = vadd.f32 0.0, %v581
    %v583 = vpop.f32.mrb[0].mxu0
    %584 = vmatprep.mubr.f32.mxu0 0.0
    %585 = vmatmul.mubr.f32.gmra.mrb[0].mxu0 %v491
    %v586 = vpop.f32.mrb[0].mxu0
    %v587 = vadd.f32 0.0, %v586
    %v588 = vpop.f32.mrb[0].mxu0
    %589 = vmatprep.mubr.f32.mxu0 0.0
    %590 = vmatmul.mubr.f32.gmra.mrb[0].mxu0 %v494
    %v591 = vpop.f32.mrb[0].mxu0
    %v592 = vadd.f32 0.0, %v591
    %v593 = vpop.f32.mrb[0].mxu0
    %594 = vmatprep.mubr.f32.mxu0 0.0
    %595 = vmatmul.mubr.f32.gmra.mrb[0].mxu0 %v497
    %v596 = vpop.f32.mrb[0].mxu0
    %v597 = vadd.f32 0.0, %v596
    %v598 = vpop.f32.mrb[0].mxu0
    %599 = vmatprep.mubr.f32.mxu0 0.0
    %600 = vmatmul.mubr.f32.gmra.mrb[0].mxu0 %v500
    %v601 = vpop.f32.mrb[0].mxu0
    %v602 = vadd.f32 0.0, %v601
    %v603 = vpop.f32.mrb[0].mxu0
    %604 = vmatprep.mubr.f32.mxu0 0.0
    %605 = vmatmul.mubr.f32.gmra.mrb[0].mxu0 %v503
    %v606 = vpop.f32.mrb[0].mxu0
    %v607 = vadd.f32 0.0, %v606
    %v608 = vpop.f32.mrb[0].mxu0
    %609 = vdwg.mxu0
    %v610 = vmul.f32 %v572, %v263
    %v611 = vmul.f32 %v577, %v264
    %v612 = vmul.f32 %v582, %v265
    %v613 = vmul.f32 %v587, %v266
    %v614 = vmul.f32 %v592, %v267
    %v615 = vmul.f32 %v597, %v268
    %v616 = vmul.f32 %v602, %v269
    %v617 = vmul.f32 %v607, %v270
    %v618 = vadd.f32 %v610, %v612
    %v619 = vadd.f32 %v611, %v613
    %v620 = vadd.f32 %v618, %v614
    %v621 = vadd.f32 %v619, %v615
    %v622 = vadd.f32 %v620, %v616
    %v623 = vadd.f32 %v621, %v617
    %v624 = vld [vmem:[#allocation5 + $0xa0] sm:$0xff]
    %v625 = vld [vmem:[#allocation5 + $0xa8] sm:$0xff]
    %v626 = vld [vmem:[#allocation5 + $0xb0] sm:$0xff]
    %v627 = vld [vmem:[#allocation5 + $0xb8] sm:$0xff]
    %v628 = vld [vmem:[#allocation5 + $0xc0] sm:$0xff]
    %v629 = vld [vmem:[#allocation5 + $0xc8] sm:$0xff]
    %v630 = vld [vmem:[#allocation5 + $0xd0] sm:$0xff]
    %v631 = vld [vmem:[#allocation5 + $0xd8] sm:$0xff]
    %v632 = vld [vmem:[#allocation5 + $0xe0] sm:$0xff]
    %v633 = vld [vmem:[#allocation5 + $0xe8] sm:$0xff]
    %v634 = vld [vmem:[#allocation5 + $0xf0] sm:$0xff]
    %v635 = vld [vmem:[#allocation5 + $0xf8] sm:$0xff]
    %v636 = vld [vmem:[#allocation5 + $0x100] sm:$0xff]
    %v637 = vld [vmem:[#allocation5 + $0x108] sm:$0xff]
    %v638 = vld [vmem:[#allocation5 + $0x110] sm:$0xff]
    %v639 = vld [vmem:[#allocation5 + $0x118] sm:$0xff]
    %v640 = vlaneseq
    %v641 = vshrl.u32 %v640, 7
    %v642 = vsub.s32 2, %v641
    %v643 = vrot.slane %v42, %v642
    %644 = vmatprep.subr.mxu0 0.0
    %645 = vmatpush1.msra.mxu0 %v624
    %646 = vmatprep.subr.mxu0 0.0
    %647 = vmatpush1.msra.mxu0 %v625
    %648 = vmatprep.subr.mxu0 0.0
    %649 = vmatpush1.msra.mxu0 %v626
    %650 = vmatprep.subr.mxu0 0.0
    %651 = vmatpush1.msra.mxu0 %v627
    %652 = vmatprep.subr.mxu0 0.0
    %653 = vmatpush1.msra.mxu0 %v628
    %654 = vmatprep.subr.mxu0 0.0
    %655 = vmatpush1.msra.mxu0 %v629
    %656 = vmatprep.subr.mxu0 0.0
    %657 = vmatpush1.msra.mxu0 %v630
    %658 = vmatprep.subr.mxu0 0.0
    %659 = vmatpush1.msra.mxu0 %v631
    %660 = vmatprep.subr.mxu0 0.0
    %661 = vmatpush1.msra.mxu0 %v632
    %662 = vmatprep.subr.mxu0 0.0
    %663 = vmatpush1.msra.mxu0 %v633
    %664 = vmatprep.subr.mxu0 0.0
    %665 = vmatpush1.msra.mxu0 %v634
    %666 = vmatprep.subr.mxu0 0.0
    %667 = vmatpush1.msra.mxu0 %v635
    %668 = vmatprep.subr.mxu0 0.0
    %669 = vmatpush1.msra.mxu0 %v636
    %670 = vmatprep.subr.mxu0 0.0
    %671 = vmatpush1.msra.mxu0 %v637
    %672 = vmatprep.subr.mxu0 0.0
    %673 = vmatpush1.msra.mxu0 %v638
    %674 = vmatprep.subr.mxu0 0.0
    %675 = vmatpush1.msra.mxu0 %v639
    %676 = vmatprep.subr.mxu0 0.0
    %677 = vmatpush1.msra.mxu0 0.0
    %678 = vmatprep.subr.mxu0 0.0
    %679 = vmatpush1.msra.mxu0 0.0
    %680 = vmatprep.subr.mxu0 0.0
    %681 = vmatpush1.msra.mxu0 0.0
    %682 = vmatprep.subr.mxu0 0.0
    %683 = vmatpush1.msra.mxu0 0.0
    %684 = vmatprep.subr.mxu0 0.0
    %685 = vmatpush1.msra.mxu0 0.0
    %686 = vmatprep.subr.mxu0 0.0
    %687 = vmatpush1.msra.mxu0 0.0
    %688 = vmatprep.subr.mxu0 0.0
    %689 = vmatpush1.msra.mxu0 0.0
    %690 = vmatprep.subr.mxu0 0.0
    %691 = vmatpush1.msra.mxu0 0.0
    %692 = vmatprep.subr.mxu0 0.0
    %693 = vmatpush1.msra.mxu0 0.0
    %694 = vmatprep.subr.mxu0 0.0
    %695 = vmatpush1.msra.mxu0 0.0
    %696 = vmatprep.subr.mxu0 0.0
    %697 = vmatpush1.msra.mxu0 0.0
    %698 = vmatprep.subr.mxu0 0.0
    %699 = vmatpush1.msra.mxu0 0.0
    %700 = vmatprep.subr.mxu0 0.0
    %701 = vmatpush1.msra.mxu0 0.0
    %702 = vmatprep.subr.mxu0 0.0
    %703 = vmatpush1.msra.mxu0 0.0
    %704 = vmatprep.subr.mxu0 0.0
    %705 = vmatpush1.msra.mxu0 0.0
    %706 = vmatprep.subr.mxu0 0.0
    %707 = vmatpush1.msra.mxu0 0.0
    %708 = vmatprep.mubr.f32.mxu0 0.0
    %709 = vmatmul.mubr.f32.gmra.mrb[0].mxu0 %v622
    %v710 = vpop.f32.mrb[0].mxu0
    %v711 = vadd.f32 %v643, %v710
    %v712 = vpop.f32.mrb[0].mxu0
    %713 = vmatprep.mubr.f32.mxu0 0.0
    %714 = vmatmul.mubr.f32.gmra.mrb[0].mxu0 %v623
    %v715 = vpop.f32.mrb[0].mxu0
    %v716 = vadd.f32 %v643, %v715
    %v717 = vpop.f32.mrb[0].mxu0
    %718 = vdwg.mxu0
    %v719 = vadd.f32 %v40, %v711
    %v720 = vadd.f32 %v41, %v716
    %v721 = vsel %vm43, %v719, 0.0
    %722 = vadd.xlane.f32.xlu0 %v721
    %v723 = vpop.xlane.xlu0 %722
    %v724 = vsel %vm43, %v720, 0.0
    %725 = vadd.xlane.f32.xlu0 %v724
    %v726 = vpop.xlane.xlu0 %725
    %v727 = vmul.f32 %v723, %v50
    %v728 = vmul.f32 %v726, %v50
    %v729 = vsub.f32 %v719, %v727
    %v730 = vsub.f32 %v720, %v728
    %v731 = vmul.f32 %v729, %v729
    %v732 = vmul.f32 %v730, %v730
    %v733 = vsel %vm43, %v731, 0.0
    %734 = vadd.xlane.f32.xlu0 %v733
    %v735 = vpop.xlane.xlu0 %734
    %v736 = vsel %vm43, %v732, 0.0
    %737 = vadd.xlane.f32.xlu0 %v736
    %v738 = vpop.xlane.xlu0 %737
    %v739 = vmul.f32 %v735, %v50
    %v740 = vmul.f32 %v738, %v50
    %v741 = vadd.f32 %v739, 1e-05
    %v742 = vadd.f32 %v740, 1e-05
    %v743 = vrsqrt.pop %v741
    %v744 = vrsqrt.pop %v742
    %v745 = vmul.f32 %v729, %v743
    %v746 = vmul.f32 %v730, %v744
    %v747 = vld [vmem:[#allocation5 + $0x120] sm:$0xff]
    %v748 = vld [vmem:[#allocation5 + $0x128] sm:$0xff]
    %v749 = vld [vmem:[#allocation5 + $0x130] sm:$0xff]
    %v750 = vld [vmem:[#allocation5 + $0x138] sm:$0xff]
    %v751 = vlaneseq
    %v752 = vshrl.u32 %v751, 7
    %v753 = vsub.s32 3, %v752
    %v754 = vrot.slane %v42, %v753
    %v756 = vsel %vm43, %v745, 0
    %v759 = vsel %vm43, %v746, 0
    %761 = vmatprep.subr.mxu0 0.0
    %762 = vmatpush1.msra.mxu0 %v747
    %763 = vmatprep.subr.mxu0 0.0
    %764 = vmatpush1.msra.mxu0 %v748
    %765 = vmatprep.subr.mxu0 0.0
    %766 = vmatpush1.msra.mxu0 %v749
    %767 = vmatprep.subr.mxu0 0.0
    %768 = vmatpush1.msra.mxu0 %v750
    %769 = vmatprep.subr.mxu0 0.0
    %770 = vmatpush1.msra.mxu0 0.0
    %771 = vmatprep.subr.mxu0 0.0
    %772 = vmatpush1.msra.mxu0 0.0
    %773 = vmatprep.subr.mxu0 0.0
    %774 = vmatpush1.msra.mxu0 0.0
    %775 = vmatprep.subr.mxu0 0.0
    %776 = vmatpush1.msra.mxu0 0.0
    %777 = vmatprep.subr.mxu0 0.0
    %778 = vmatpush1.msra.mxu0 0.0
    %779 = vmatprep.subr.mxu0 0.0
    %780 = vmatpush1.msra.mxu0 0.0
    %781 = vmatprep.subr.mxu0 0.0
    %782 = vmatpush1.msra.mxu0 0.0
    %783 = vmatprep.subr.mxu0 0.0
    %784 = vmatpush1.msra.mxu0 0.0
    %785 = vmatprep.subr.mxu0 0.0
    %786 = vmatpush1.msra.mxu0 0.0
    %787 = vmatprep.subr.mxu0 0.0
    %788 = vmatpush1.msra.mxu0 0.0
    %789 = vmatprep.subr.mxu0 0.0
    %790 = vmatpush1.msra.mxu0 0.0
    %791 = vmatprep.subr.mxu0 0.0
    %792 = vmatpush1.msra.mxu0 0.0
    %793 = vmatprep.subr.mxu0 0.0
    %794 = vmatpush1.msra.mxu0 0.0
    %795 = vmatprep.subr.mxu0 0.0
    %796 = vmatpush1.msra.mxu0 0.0
    %797 = vmatprep.subr.mxu0 0.0
    %798 = vmatpush1.msra.mxu0 0.0
    %799 = vmatprep.subr.mxu0 0.0
    %800 = vmatpush1.msra.mxu0 0.0
    %801 = vmatprep.subr.mxu0 0.0
    %802 = vmatpush1.msra.mxu0 0.0
    %803 = vmatprep.subr.mxu0 0.0
    %804 = vmatpush1.msra.mxu0 0.0
    %805 = vmatprep.subr.mxu0 0.0
    %806 = vmatpush1.msra.mxu0 0.0
    %807 = vmatprep.subr.mxu0 0.0
    %808 = vmatpush1.msra.mxu0 0.0
    %809 = vmatprep.subr.mxu0 0.0
    %810 = vmatpush1.msra.mxu0 0.0
    %811 = vmatprep.subr.mxu0 0.0
    %812 = vmatpush1.msra.mxu0 0.0
    %813 = vmatprep.subr.mxu0 0.0
    %814 = vmatpush1.msra.mxu0 0.0
    %815 = vmatprep.subr.mxu0 0.0
    %816 = vmatpush1.msra.mxu0 0.0
    %817 = vmatprep.subr.mxu0 0.0
    %818 = vmatpush1.msra.mxu0 0.0
    %819 = vmatprep.subr.mxu0 0.0
    %820 = vmatpush1.msra.mxu0 0.0
    %821 = vmatprep.subr.mxu0 0.0
    %822 = vmatpush1.msra.mxu0 0.0
    %823 = vmatprep.subr.mxu0 0.0
    %824 = vmatpush1.msra.mxu0 0.0
    %825 = vmatprep.mubr.f32.mxu0 0.0
    %826 = vmatmul.mubr.f32.gmra.mrb[0].mxu0 %v756
    %v827 = vpop.f32.mrb[0].mxu0
    %v828 = vadd.f32 %v754, %v827
    %v829 = vpop.f32.mrb[0].mxu0
    %830 = vmatprep.mubr.f32.mxu0 0.0
    %831 = vmatmul.mubr.f32.gmra.mrb[0].mxu0 %v759
    %v832 = vpop.f32.mrb[0].mxu0
    %v833 = vadd.f32 %v754, %v832
    %v834 = vpop.f32.mrb[0].mxu0
    %835 = vdwg.mxu0
    %v836 = vmul.f32 %v828, 0.5
    %v837 = vmul.f32 %v833, 0.5
    %v838 = vmul.f32 %v828, 0.044715
    %v839 = vmul.f32 %v833, 0.044715
    %v840 = vmul.f32 %v838, %v828
    %v841 = vmul.f32 %v839, %v833
    %v842 = vmul.f32 %v840, %v828
    %v843 = vmul.f32 %v841, %v833
    %v844 = vadd.f32 %v828, %v842
    %v845 = vadd.f32 %v833, %v843
    %v846 = vmul.f32 %v844, 0.7978846
    %v847 = vmul.f32 %v845, 0.7978846
    %v848 = vtanh.pop %v846
    %v849 = vtanh.pop %v847
    %v850 = vadd.f32 %v848, 1.0
    %v851 = vadd.f32 %v849, 1.0
    %v852 = vmul.f32 %v836, %v850
    %v853 = vmul.f32 %v837, %v851
    %v854 = vld [vmem:[#allocation5 + $0x140] sm:$0xff]
    %v855 = vld [vmem:[#allocation5 + $0x148] sm:$0xff]
    %v856 = vld [vmem:[#allocation5 + $0x150] sm:$0xff]
    %v857 = vld [vmem:[#allocation5 + $0x158] sm:$0xff]
    %v858 = vld [vmem:[#allocation5 + $0x160] sm:$0xff]
    %v859 = vld [vmem:[#allocation5 + $0x168] sm:$0xff]
    %v860 = vld [vmem:[#allocation5 + $0x170] sm:$0xff]
    %v861 = vld [vmem:[#allocation5 + $0x178] sm:$0xff]
    %v862 = vld [vmem:[#allocation5 + $0x180] sm:$0xff]
    %v863 = vld [vmem:[#allocation5 + $0x188] sm:$0xff]
    %v864 = vld [vmem:[#allocation5 + $0x190] sm:$0xff]
    %v865 = vld [vmem:[#allocation5 + $0x198] sm:$0xff]
    %v866 = vld [vmem:[#allocation5 + $0x1a0] sm:$0xff]
    %v867 = vld [vmem:[#allocation5 + $0x1a8] sm:$0xff]
    %v868 = vld [vmem:[#allocation5 + $0x1b0] sm:$0xff]
    %v869 = vld [vmem:[#allocation5 + $0x1b8] sm:$0xff]
    %v870 = vlaneseq
    %v871 = vshrl.u32 %v870, 7
    %v872 = vsub.s32 4, %v871
    %v873 = vrot.slane %v42, %v872
    %874 = vmatprep.subr.mxu0 0.0
    %875 = vmatpush1.msra.mxu0 %v854
    %876 = vmatprep.subr.mxu0 0.0
    %877 = vmatpush1.msra.mxu0 %v855
    %878 = vmatprep.subr.mxu0 0.0
    %879 = vmatpush1.msra.mxu0 %v856
    %880 = vmatprep.subr.mxu0 0.0
    %881 = vmatpush1.msra.mxu0 %v857
    %882 = vmatprep.subr.mxu0 0.0
    %883 = vmatpush1.msra.mxu0 %v858
    %884 = vmatprep.subr.mxu0 0.0
    %885 = vmatpush1.msra.mxu0 %v859
    %886 = vmatprep.subr.mxu0 0.0
    %887 = vmatpush1.msra.mxu0 %v860
    %888 = vmatprep.subr.mxu0 0.0
    %889 = vmatpush1.msra.mxu0 %v861
    %890 = vmatprep.subr.mxu0 0.0
    %891 = vmatpush1.msra.mxu0 %v862
    %892 = vmatprep.subr.mxu0 0.0
    %893 = vmatpush1.msra.mxu0 %v863
    %894 = vmatprep.subr.mxu0 0.0
    %895 = vmatpush1.msra.mxu0 %v864
    %896 = vmatprep.subr.mxu0 0.0
    %897 = vmatpush1.msra.mxu0 %v865
    %898 = vmatprep.subr.mxu0 0.0
    %899 = vmatpush1.msra.mxu0 %v866
    %900 = vmatprep.subr.mxu0 0.0
    %901 = vmatpush1.msra.mxu0 %v867
    %902 = vmatprep.subr.mxu0 0.0
    %903 = vmatpush1.msra.mxu0 %v868
    %904 = vmatprep.subr.mxu0 0.0
    %905 = vmatpush1.msra.mxu0 %v869
    %906 = vmatprep.subr.mxu0 0.0
    %907 = vmatpush1.msra.mxu0 0.0
    %908 = vmatprep.subr.mxu0 0.0
    %909 = vmatpush1.msra.mxu0 0.0
    %910 = vmatprep.subr.mxu0 0.0
    %911 = vmatpush1.msra.mxu0 0.0
    %912 = vmatprep.subr.mxu0 0.0
    %913 = vmatpush1.msra.mxu0 0.0
    %914 = vmatprep.subr.mxu0 0.0
    %915 = vmatpush1.msra.mxu0 0.0
    %916 = vmatprep.subr.mxu0 0.0
    %917 = vmatpush1.msra.mxu0 0.0
    %918 = vmatprep.subr.mxu0 0.0
    %919 = vmatpush1.msra.mxu0 0.0
    %920 = vmatprep.subr.mxu0 0.0
    %921 = vmatpush1.msra.mxu0 0.0
    %922 = vmatprep.subr.mxu0 0.0
    %923 = vmatpush1.msra.mxu0 0.0
    %924 = vmatprep.subr.mxu0 0.0
    %925 = vmatpush1.msra.mxu0 0.0
    %926 = vmatprep.subr.mxu0 0.0
    %927 = vmatpush1.msra.mxu0 0.0
    %928 = vmatprep.subr.mxu0 0.0
    %929 = vmatpush1.msra.mxu0 0.0
    %930 = vmatprep.subr.mxu0 0.0
    %931 = vmatpush1.msra.mxu0 0.0
    %932 = vmatprep.subr.mxu0 0.0
    %933 = vmatpush1.msra.mxu0 0.0
    %934 = vmatprep.subr.mxu0 0.0
    %935 = vmatpush1.msra.mxu0 0.0
    %936 = vmatprep.subr.mxu0 0.0
    %937 = vmatpush1.msra.mxu0 0.0
    %938 = vmatprep.mubr.f32.mxu0 0.0
    %939 = vmatmul.mubr.f32.gmra.mrb[0].mxu0 %v852
    %v940 = vpop.f32.mrb[0].mxu0
    %v941 = vadd.f32 %v873, %v940
    %v942 = vpop.f32.mrb[0].mxu0
    %943 = vmatprep.mubr.f32.mxu0 0.0
    %944 = vmatmul.mubr.f32.gmra.mrb[0].mxu0 %v853
    %v945 = vpop.f32.mrb[0].mxu0
    %v946 = vadd.f32 %v873, %v945
    %v947 = vpop.f32.mrb[0].mxu0
    %948 = vdwg.mxu0
    %v949 = vadd.f32 %v719, %v941
    %v950 = vadd.f32 %v720, %v946
    %v951 = vlaneseq
    %v952 = vshrl.u32 %v951, 7
    %v953 = vsub.s32 5, %v952
    %v954 = vrot.slane %v42, %v953
    %v955 = vmul.f32 %v152, %v954
    %v956 = vmul.f32 %v157, %v954
    %v957 = vadd.f32 %v949, %v955
    %v958 = vadd.f32 %v950, %v956
    %959 = vst [vmem:[#allocation7] sm:$0xff] %v957
    %960 = vst [vmem:[#allocation7 + $0x8] sm:$0xff] %v958
    // Predicated region
    $region18: #{tpu_custom_call.1} parent=1 // pred_check
      _
    $region19: #{tpu_custom_call.1} parent=1 // pred_check_branch
      %962 = sbr.rel (0) target = $region21
    $region20: #{tpu_custom_call.1} parent=1 // pred_region
      %s964 = ssub.s32 256, 256
      %965 = vsyncadd [#allocation4], %s964
      %s966 = sshll.u32 [#allocation7], 4
      %s967 = int_to_ptr.vmem [resolvable:$true] %s966
      %972 = dma.vmem_to_hbm [thread:$0]  %s967, 256, %s2, [#allocation4], 128, 128, 8
    $region21: #{tpu_custom_call.1} parent=1 // pred_fallthru
      _
    // Predicated region
    $region22: #{tpu_custom_call.1} parent=1 // pred_check
      _
    $region23: #{tpu_custom_call.1} parent=1 // pred_check_branch
      %974 = sbr.rel (0) target = $region25
    $region24: #{tpu_custom_call.1} parent=1 // pred_region
      %975 = dma.done [#allocation4], 256
    $region25: #{tpu_custom_call.1} parent=1 // pred_fallthru
      _
    %976 = vsyncpa [#allocation3], 1
    %977 = vsyncpa [#allocation6], 1
    %978 = vsyncpa [#allocation4], 1

</llo_original>
